<compile_context>
chip_gen: v6e
topology: v6e:2x2x1
jax: 0.10.0
libtpu: 0.0.40
codegen_flags: <defaults>
</compile_context>

<pallas_src>
import jax
import jax.numpy as jnp
from jax import lax
from jax.experimental import pallas as pl
from jax.experimental.pallas import tpu as pltpu

INPUT_SIZE = 8   # extract_features_new produces 8 features per sample
H1 = 16
H2 = 8
OUT = 1
BN_EPS = 1e-5
LANES = 128
DEFAULT_BATCH_TILE = 8192   # ~256 KiB of f32 x rows per grid step; sweep 4096-16384


def eegnet_kernel(x_ref, w1_ref, b1_ref, w2_ref, b2_ref, w3_ref, b3_ref, o_ref):
    """x_ref: (TB, F) natural row-major tile; weights (H_out, H_in); biases (H_out, 1).

    Activations are feature-major (H, TB): batch on the 128-lane axis, lane-dense
    output stores, no masked vst.
    """
    x = x_ref[...]                                                      # (TB, 8)

    # fc1 (+ folded bn1) + relu.  Contract the feature axis of both operands
    # (w1 @ x.T) via NT dimension numbers -- no explicit transpose of x needed.
    h = lax.dot_general(w1_ref[...], x, (((1,), (1,)), ((), ())),
                        preferred_element_type=jnp.float32) + b1_ref[...]
    h = jnp.maximum(h, 0.0).astype(x.dtype)                             # (16, TB)
    # dropout(p=0.5): identity in eval mode

    # fc2 (+ folded bn2) + relu
    h = jnp.dot(w2_ref[...], h, preferred_element_type=jnp.float32) + b2_ref[...]
    h = jnp.maximum(h, 0.0)                                             # (8, TB) f32
    # dropout(p=0.5): identity in eval mode

    # fc3 (out dim = 1): VPU broadcast-multiply + sublane reduce (MXU not worth it)
    y = jnp.sum(w3_ref[...] * h, axis=0, keepdims=True) + b3_ref[...]   # (1, TB)

    # Exact, numerically stable sigmoid; exp lands on the otherwise-idle EUP slot.
    z = jnp.exp(-jnp.abs(y))
    inv = 1.0 / (1.0 + z)
    o_ref[...] = jnp.where(y >= 0, inv, z * inv).astype(o_ref.dtype)


def _cdiv(a, b):
    return (a + b - 1) // b


def _round_up(n, m):
    return _cdiv(n, m) * m


def fold_params(p, compute_dtype=jnp.float32):
    """Fold eval-mode BatchNorm into the linear layers.

    Returns weights as (H_out, H_in) in compute_dtype (matching x), biases as
    (H_out, 1) f32, and fc3 weight as (H2, 1) f32 for the VPU reduce.
    """
    s1 = p["g1"] * lax.rsqrt(p["v1"] + BN_EPS)                      # (H1,)
    w1f = (p["w1"] * s1[:, None]).astype(compute_dtype)             # (H1, F)
    b1f = (((p["b1"] - p["m1"]) * s1 + p["be1"])[:, None]).astype(jnp.float32)

    s2 = p["g2"] * lax.rsqrt(p["v2"] + BN_EPS)                      # (H2,)
    w2f = (p["w2"] * s2[:, None]).astype(compute_dtype)             # (H2, H1)
    b2f = (((p["b2"] - p["m2"]) * s2 + p["be2"])[:, None]).astype(jnp.float32)

    w3f = jnp.transpose(p["w3"]).astype(jnp.float32)                # (H2, OUT)
    b3f = p["b3"][:, None].astype(jnp.float32)                      # (OUT, 1)
    return w1f, b1f, w2f, b2f, w3f, b3f


def eegnet_forward(x, params, *, batch_tile=DEFAULT_BATCH_TILE):
    """x: (B, INPUT_SIZE) float32 or bfloat16 -> (B, 1) float32."""
    B, F = x.shape
    assert F == INPUT_SIZE, (F, INPUT_SIZE)
    w1f, b1f, w2f, b2f, w3f, b3f = fold_params(params, x.dtype)

    # Tile the batch.  Force >=2 grid steps once B > 256 so both v7x TensorCores
    # get work; recompute tb so padding waste stays under 128 rows per step.
    batch_tile = max(int(batch_tile), LANES)
    n_steps = max(_cdiv(B, batch_tile), 2 if B > 2 * LANES else 1)
    tb = _round_up(_cdiv(B, n_steps), LANES)
    b_pad = n_steps * tb
    if b_pad != B:
        # TODO(synk): this pad is one extra HBM copy of x; callers that supply
        # B as an exact n_steps*128 multiple (or pre-padded batches) avoid it.
        x = jnp.pad(x, ((0, b_pad - B), (0, 0)))
    grid = (n_steps,)

    # Constant index_maps keep the (tiny) weights/biases resident across steps.
    const = lambda i: (0, 0)
    in_specs = [
        pl.BlockSpec((tb, INPUT_SIZE), lambda i: (i, 0)),      # x rows: contiguous DMA
        pl.BlockSpec((H1, INPUT_SIZE), const),                 # w1' (bn1 folded)
        pl.BlockSpec((H1, 1), const),                          # b1'
        pl.BlockSpec((H2, H1), const),                         # w2' (bn2 folded)
        pl.BlockSpec((H2, 1), const),                          # b2'
        pl.BlockSpec((H2, OUT), const),                        # w3 (transposed)
        pl.BlockSpec((OUT, 1), const),                         # b3
    ]
    out_specs = pl.BlockSpec((OUT, tb), lambda i: (0, i))      # lane-dense output

    param_bytes = 4 * (H1 * INPUT_SIZE + H1 + H2 * H1 + H2 + H2 * OUT + OUT)
    cost = pl.CostEstimate(
        flops=2 * b_pad * (INPUT_SIZE * H1 + H1 * H2 + H2 * OUT),
        transcendentals=b_pad,
        bytes_accessed=b_pad * (INPUT_SIZE * x.dtype.itemsize + OUT * 4) + param_bytes,
    )

    outT = pl.pallas_call(
        eegnet_kernel,
        out_shape=jax.ShapeDtypeStruct((OUT, b_pad), jnp.float32),
        grid=grid,
        in_specs=in_specs,
        out_specs=out_specs,
        compiler_params=pltpu.CompilerParams(
            dimension_semantics=("parallel",),        # shards batch tiles on v7x's 2 TCs
            vmem_limit_bytes=32 * 1024 * 1024,        # need ~12 MiB at tb=8192; headroom
        ),
        cost_estimate=cost,
    )(x, w1f, b1f, w2f, b2f, w3f, b3f)

    return jnp.transpose(outT[:, :B])                # (B, 1); tiny relayout


def init_params(key):
    """PyTorch-layout parameters: Linear weight (out, in), BatchNorm1d per-feature."""
    ks = jax.random.split(key, 8)
    return {
        "w1": jax.random.normal(ks[0], (H1, INPUT_SIZE), jnp.float32) * 0.1,
        "b1": jax.random.normal(ks[1], (H1,), jnp.float32) * 0.1,
        "w2": jax.random.normal(ks[2], (H2, H1), jnp.float32) * 0.1,
        "b2": jax.random.normal(ks[3], (H2,), jnp.float32) * 0.1,
        "w3": jax.random.normal(ks[4], (OUT, H2), jnp.float32) * 0.1,
        "b3": jax.random.normal(ks[5], (OUT,), jnp.float32) * 0.1,
        # BatchNorm1d(16) affine + running stats
        "g1": jnp.ones((H1,), jnp.float32),
        "be1": jnp.zeros((H1,), jnp.float32),
        "m1": jax.random.normal(ks[6], (H1,), jnp.float32) * 0.05,
        "v1": jnp.full((H1,), 1.0, jnp.float32),
        # BatchNorm1d(8) affine + running stats
        "g2": jnp.ones((H2,), jnp.float32),
        "be2": jnp.zeros((H2,), jnp.float32),
        "m2": jax.random.normal(ks[7], (H2,), jnp.float32) * 0.05,
        "v2": jnp.full((H2,), 1.0, jnp.float32),
    }


def eegnet_reference(x, p):
    """Pure-JAX reference (eval-mode BN, exact sigmoid, full-precision matmuls)."""
    hp = lax.Precision.HIGHEST
    h = jnp.dot(x, p["w1"].T, precision=hp) + p["b1"]
    h = (h - p["m1"]) / jnp.sqrt(p["v1"] + BN_EPS) * p["g1"] + p["be1"]
    h = jnp.maximum(h, 0.0)
    h = jnp.dot(h, p["w2"].T, precision=hp) + p["b2"]
    h = (h - p["m2"]) / jnp.sqrt(p["v2"] + BN_EPS) * p["g2"] + p["be2"]
    h = jnp.maximum(h, 0.0)
    y = jnp.dot(h, p["w3"].T, precision=hp) + p["b3"]
    return jax.nn.sigmoid(y)


if __name__ == "__main__":
    key = jax.random.PRNGKey(0)
    kx, kp = jax.random.split(key)
    B = 2
    x = jax.random.normal(kx, (B, INPUT_SIZE), jnp.float32)
    params = init_params(kp)

    out = jax.block_until_ready(eegnet_forward(x, params))
    ref = eegnet_reference(x, params)

    assert out.shape == (B, OUT), out.shape
    # Exact sigmoid + f32 accumulation: remaining slack only covers BN-folding
    # roundoff and possible reduced-precision MXU passes for the f32 matmuls.
    assert jnp.allclose(out, ref, atol=5e-4, rtol=5e-4), (out, ref)
    print("KERNEL_OK")
</pallas_src>

<mosaic_0001>
module attributes {stable_mosaic.version = 11 : i64} {
  func.func @eegnet_kernel(%arg0: i32, %arg1: memref<128x8xf32, #tpu.memory_space<vmem>>, %arg2: memref<16x8xf32, #tpu.memory_space<vmem>>, %arg3: memref<16x1xf32, #tpu.memory_space<vmem>>, %arg4: memref<8x16xf32, #tpu.memory_space<vmem>>, %arg5: memref<8x1xf32, #tpu.memory_space<vmem>>, %arg6: memref<8x1xf32, #tpu.memory_space<vmem>>, %arg7: memref<1x1xf32, #tpu.memory_space<vmem>>, %arg8: memref<1x128xf32, #tpu.memory_space<vmem>>) attributes {dimension_semantics = [#tpu.dimension_semantics<parallel>], iteration_bounds = array<i64: 1>, scalar_prefetch = 0 : i64, scratch_operands = 0 : i64, tpu.core_type = #tpu.core_type<tc>, window_params = [{transform_indices = @transform_0, window_bounds = array<i64: 128, 8>}, {pipeline_mode = #tpu.pipeline_mode<synchronous>, transform_indices = @transform_1, window_bounds = array<i64: 16, 8>}, {pipeline_mode = #tpu.pipeline_mode<synchronous>, transform_indices = @transform_2, window_bounds = array<i64: 16, 1>}, {pipeline_mode = #tpu.pipeline_mode<synchronous>, transform_indices = @transform_3, window_bounds = array<i64: 8, 16>}, {pipeline_mode = #tpu.pipeline_mode<synchronous>, transform_indices = @transform_4, window_bounds = array<i64: 8, 1>}, {pipeline_mode = #tpu.pipeline_mode<synchronous>, transform_indices = @transform_5, window_bounds = array<i64: 8, 1>}, {pipeline_mode = #tpu.pipeline_mode<synchronous>, transform_indices = @transform_6, window_bounds = array<i64: 1, 1>}, {transform_indices = @transform_7, window_bounds = array<i64: 1, 128>}]} {
    %c0 = arith.constant 0 : index
    %c0_0 = arith.constant 0 : index
    %0 = vector.load %arg1[%c0, %c0_0] : memref<128x8xf32, #tpu.memory_space<vmem>>, vector<128x8xf32>
    %c0_1 = arith.constant 0 : index
    %c0_2 = arith.constant 0 : index
    %1 = vector.load %arg2[%c0_1, %c0_2] : memref<16x8xf32, #tpu.memory_space<vmem>>, vector<16x8xf32>
    %cst = arith.constant dense<0.000000e+00> : vector<16x128xf32>
    %2 = tpu.matmul %1, %0, %cst {dimension_numbers = #tpu.dot_dimension_numbers<[1], [1], [0], [0], [0, 0, 1, 0], [], []>} : vector<16x8xf32>, vector<128x8xf32>, vector<16x128xf32> -> vector<16x128xf32>
    %c0_3 = arith.constant 0 : index
    %c0_4 = arith.constant 0 : index
    %3 = vector.load %arg3[%c0_3, %c0_4] : memref<16x1xf32, #tpu.memory_space<vmem>>, vector<16x1xf32>
    %4 = vector.broadcast %3 : vector<16x1xf32> to vector<16x128xf32>
    %5 = arith.addf %2, %4 : vector<16x128xf32>
    %cst_5 = arith.constant 0.000000e+00 : f32
    %6 = vector.broadcast %cst_5 : f32 to vector<16x128xf32>
    %7 = arith.maximumf %5, %6 : vector<16x128xf32>
    %c0_6 = arith.constant 0 : index
    %c0_7 = arith.constant 0 : index
    %8 = vector.load %arg4[%c0_6, %c0_7] : memref<8x16xf32, #tpu.memory_space<vmem>>, vector<8x16xf32>
    %cst_8 = arith.constant dense<0.000000e+00> : vector<8x128xf32>
    %9 = tpu.matmul %8, %7, %cst_8 {dimension_numbers = #tpu.dot_dimension_numbers<[1], [0], [0], [1], [0, 0, 1, 1], [], []>} : vector<8x16xf32>, vector<16x128xf32>, vector<8x128xf32> -> vector<8x128xf32>
    %c0_9 = arith.constant 0 : index
    %c0_10 = arith.constant 0 : index
    %10 = vector.load %arg5[%c0_9, %c0_10] : memref<8x1xf32, #tpu.memory_space<vmem>>, vector<8x1xf32>
    %11 = vector.broadcast %10 : vector<8x1xf32> to vector<8x128xf32>
    %12 = arith.addf %9, %11 : vector<8x128xf32>
    %cst_11 = arith.constant 0.000000e+00 : f32
    %13 = vector.broadcast %cst_11 : f32 to vector<8x128xf32>
    %14 = arith.maximumf %12, %13 : vector<8x128xf32>
    %c0_12 = arith.constant 0 : index
    %c0_13 = arith.constant 0 : index
    %15 = vector.load %arg6[%c0_12, %c0_13] : memref<8x1xf32, #tpu.memory_space<vmem>>, vector<8x1xf32>
    %16 = vector.broadcast %15 : vector<8x1xf32> to vector<8x128xf32>
    %17 = arith.mulf %16, %14 : vector<8x128xf32>
    %cst_14 = arith.constant dense<0.000000e+00> : vector<128xf32>
    %18 = vector.multi_reduction <add>, %17, %cst_14 [0] : vector<8x128xf32> to vector<128xf32>
    %19 = vector.shape_cast %18 : vector<128xf32> to vector<1x128xf32>
    %c0_15 = arith.constant 0 : index
    %c0_16 = arith.constant 0 : index
    %20 = vector.load %arg7[%c0_15, %c0_16] : memref<1x1xf32, #tpu.memory_space<vmem>>, vector<1x1xf32>
    %21 = vector.broadcast %20 : vector<1x1xf32> to vector<1x128xf32>
    %22 = arith.addf %19, %21 : vector<1x128xf32>
    %23 = math.absf %22 : vector<1x128xf32>
    %cst_17 = arith.constant 0.000000e+00 : f32
    %24 = vector.broadcast %cst_17 : f32 to vector<1x128xf32>
    %25 = arith.subf %24, %23 : vector<1x128xf32>
    %26 = math.exp %25 : vector<1x128xf32>
    %cst_18 = arith.constant 1.000000e+00 : f32
    %27 = vector.broadcast %cst_18 : f32 to vector<1x128xf32>
    %28 = arith.addf %27, %26 : vector<1x128xf32>
    %cst_19 = arith.constant 1.000000e+00 : f32
    %29 = vector.broadcast %cst_19 : f32 to vector<1x128xf32>
    %30 = arith.divf %29, %28 : vector<1x128xf32>
    %cst_20 = arith.constant 0.000000e+00 : f32
    %31 = vector.broadcast %cst_20 : f32 to vector<1x128xf32>
    %32 = arith.cmpf oge, %22, %31 : vector<1x128xf32>
    %33 = arith.mulf %26, %30 : vector<1x128xf32>
    %34 = arith.select %32, %30, %33 : vector<1x128xi1>, vector<1x128xf32>
    %c0_21 = arith.constant 0 : index
    %c0_22 = arith.constant 0 : index
    %35 = vector.load %arg8[%c0_21, %c0_22] : memref<1x128xf32, #tpu.memory_space<vmem>>, vector<1x128xf32>
    tpu.vector_store %arg8[%c0_21, %c0_22], %34 {strides = array<i32>} : memref<1x128xf32, #tpu.memory_space<vmem>>, vector<1x128xf32>,
    return
  }
  func.func @transform_0(%arg0: i32) -> (i32, i32) {
    %c0_i32 = arith.constant 0 : i32
    %c0_i32_0 = arith.constant 0 : i32
    return %arg0, %c0_i32 : i32, i32
  }
  func.func @transform_1(%arg0: i32) -> (i32, i32) {
    %c0_i32 = arith.constant 0 : i32
    %c0_i32_0 = arith.constant 0 : i32
    %c0_i32_1 = arith.constant 0 : i32
    return %c0_i32, %c0_i32_0 : i32, i32
  }
  func.func @transform_2(%arg0: i32) -> (i32, i32) {
    %c0_i32 = arith.constant 0 : i32
    %c0_i32_0 = arith.constant 0 : i32
    %c0_i32_1 = arith.constant 0 : i32
    return %c0_i32, %c0_i32_0 : i32, i32
  }
  func.func @transform_3(%arg0: i32) -> (i32, i32) {
    %c0_i32 = arith.constant 0 : i32
    %c0_i32_0 = arith.constant 0 : i32
    %c0_i32_1 = arith.constant 0 : i32
    return %c0_i32, %c0_i32_0 : i32, i32
  }
  func.func @transform_4(%arg0: i32) -> (i32, i32) {
    %c0_i32 = arith.constant 0 : i32
    %c0_i32_0 = arith.constant 0 : i32
    %c0_i32_1 = arith.constant 0 : i32
    return %c0_i32, %c0_i32_0 : i32, i32
  }
  func.func @transform_5(%arg0: i32) -> (i32, i32) {
    %c0_i32 = arith.constant 0 : i32
    %c0_i32_0 = arith.constant 0 : i32
    %c0_i32_1 = arith.constant 0 : i32
    return %c0_i32, %c0_i32_0 : i32, i32
  }
  func.func @transform_6(%arg0: i32) -> (i32, i32) {
    %c0_i32 = arith.constant 0 : i32
    %c0_i32_0 = arith.constant 0 : i32
    %c0_i32_1 = arith.constant 0 : i32
    return %c0_i32, %c0_i32_0 : i32, i32
  }
  func.func @transform_7(%arg0: i32) -> (i32, i32) {
    %c0_i32 = arith.constant 0 : i32
    %c0_i32_0 = arith.constant 0 : i32
    return %c0_i32, %arg0 : i32, i32
  }
}

</mosaic_0001>

<llo_original>
// kernel: tpu_custom_call.1
$region0: #{tpu_custom_call.1}
  #allocation0 [shape = 'u32[]', space=smem, size = 0x4, offset = 0x4, fixed_abs, tag = 'smem constant byte address 0x4 - core index']
  #allocation1 [shape = 'u32[144,128]{1,0:T(1,128)}', space=vmem, size = 0x12000, scoped, tag = 'internal scratch']
  #allocation2 [shape = 'f32[1,1]{1,0:T(1,128)S(1)}', space=vmem, size = 0x200, scoped, tag = 'scoped memory for tpu_custom_call.1']
  %s0 = inlined_call_operand.vmem [shape: f32[128,8], index: 0, kind: input, shape index: {}]
  %s1 = inlined_call_operand.vmem [shape: f32[16,8], index: 1, kind: input, shape index: {}]
  %s2 = inlined_call_operand.vmem [shape: f32[16,1], index: 2, kind: input, shape index: {}]
  %s3 = inlined_call_operand.vmem [shape: f32[8,16], index: 3, kind: input, shape index: {}]
  %s4 = inlined_call_operand.vmem [shape: f32[8,1], index: 4, kind: input, shape index: {}]
  %s5 = inlined_call_operand.vmem [shape: f32[8,1], index: 5, kind: input, shape index: {}]
  %s6 = inlined_call_operand.<no memory space> [shape: f32[1,1], index: 6, kind: input, shape index: {}]
  %s7 = inlined_call_operand.hbm [shape: f32[1,128], index: 7, kind: output, shape index: {}]
  %s8 = sld [smem:[#allocation0]]
  $region38: #{tpu_custom_call.1} parent=0
    _
  %s10 = ssub.s32 1, %s8
  %s11 = scalar_select 0, %s10, %s8
  %v12 = vstv %s6
  %13 = vst [vmem:[#allocation2] sm:$0x1] %v12
  $region1: #{tpu_custom_call.1} parent=0
    #allocation3 [shape = 'u8[512]{0}', space=vmem, size = 0x400, scoped, tag = 'output window, operand 0, single buffered']
    #allocation4 [shape = 's32[1]{0}', space=sflag, size = 0x4, scoped, tag = 'scoped memory for tpu_custom_call.1']
    %14 = vsyncpa [#allocation4], 0
    // Predicated region
    $region2: #{tpu_custom_call.1} parent=1 // pred_check
      _
    $region3: #{tpu_custom_call.1} parent=1 // pred_check_branch
      %16 = sbr.rel (0) target = $region5
    $region4: #{tpu_custom_call.1} parent=1 // pred_region
      _
    $region5: #{tpu_custom_call.1} parent=1 // pred_fallthru
      _
    // Predicated region
    $region6: #{tpu_custom_call.1} parent=1 // pred_check
      _
    $region7: #{tpu_custom_call.1} parent=1 // pred_check_branch
      %18 = sbr.rel (0) target = $region9
    $region8: #{tpu_custom_call.1} parent=1 // pred_region
      _
    $region9: #{tpu_custom_call.1} parent=1 // pred_fallthru
      _
    // Predicated region
    $region10: #{tpu_custom_call.1} parent=1 // pred_check
      _
    $region11: #{tpu_custom_call.1} parent=1 // pred_check_branch
      %20 = sbr.rel (0) target = $region13
    $region12: #{tpu_custom_call.1} parent=1 // pred_region
      _
    $region13: #{tpu_custom_call.1} parent=1 // pred_fallthru
      _
    // Predicated region
    $region14: #{tpu_custom_call.1} parent=1 // pred_check
      _
    $region15: #{tpu_custom_call.1} parent=1 // pred_check_branch
      %22 = sbr.rel (0) target = $region17
    $region16: #{tpu_custom_call.1} parent=1 // pred_region
      _
    $region17: #{tpu_custom_call.1} parent=1 // pred_fallthru
      _
    // Predicated region
    $region18: #{tpu_custom_call.1} parent=1 // pred_check
      _
    $region19: #{tpu_custom_call.1} parent=1 // pred_check_branch
      %24 = sbr.rel (0) target = $region21
    $region20: #{tpu_custom_call.1} parent=1 // pred_region
      _
    $region21: #{tpu_custom_call.1} parent=1 // pred_fallthru
      _
    // Predicated region
    $region22: #{tpu_custom_call.1} parent=1 // pred_check
      _
    $region23: #{tpu_custom_call.1} parent=1 // pred_check_branch
      %26 = sbr.rel (0) target = $region25
    $region24: #{tpu_custom_call.1} parent=1 // pred_region
      _
    $region25: #{tpu_custom_call.1} parent=1 // pred_fallthru
      _
    // Predicated region
    $region26: #{tpu_custom_call.1} parent=1 // pred_check
      _
    $region27: #{tpu_custom_call.1} parent=1 // pred_check_branch
      %28 = sbr.rel (0) target = $region29
    $region28: #{tpu_custom_call.1} parent=1 // pred_region
      _
    $region29: #{tpu_custom_call.1} parent=1 // pred_fallthru
      _
    %v29 = vld [vmem:[%s0] sm:$0xff]
    %v30 = vld [vmem:[%s0 + $0x8] sm:$0xff]
    %v31 = vld [vmem:[%s0 + $0x10] sm:$0xff]
    %v32 = vld [vmem:[%s0 + $0x18] sm:$0xff]
    %v33 = vld [vmem:[%s0 + $0x20] sm:$0xff]
    %v34 = vld [vmem:[%s0 + $0x28] sm:$0xff]
    %v35 = vld [vmem:[%s0 + $0x30] sm:$0xff]
    %v36 = vld [vmem:[%s0 + $0x38] sm:$0xff]
    %v37 = vld [vmem:[%s0 + $0x40] sm:$0xff]
    %v38 = vld [vmem:[%s0 + $0x48] sm:$0xff]
    %v39 = vld [vmem:[%s0 + $0x50] sm:$0xff]
    %v40 = vld [vmem:[%s0 + $0x58] sm:$0xff]
    %v41 = vld [vmem:[%s0 + $0x60] sm:$0xff]
    %v42 = vld [vmem:[%s0 + $0x68] sm:$0xff]
    %v43 = vld [vmem:[%s0 + $0x70] sm:$0xff]
    %v44 = vld [vmem:[%s0 + $0x78] sm:$0xff]
    %v45 = vld [vmem:[%s1] sm:$0xff]
    %v46 = vld [vmem:[%s1 + $0x8] sm:$0xff]
    %v47 = vld [vmem:[%s2] sm:$0xff]
    %v48 = vld [vmem:[%s2 + $0x8] sm:$0xff]
    %50 = vset.pattern.permute.xlu0 0
    %51 = vperm.xlu0 %50, %v47
    %v52 = vpop.permute.xlu0 %51
    %55 = vset.pattern.permute.xlu0 0
    %56 = vperm.xlu0 %55, %v48
    %v57 = vpop.permute.xlu0 %56
    %vm59 = vcmask 64512
    %v61 = vsel %vm59, %v45, 0
    %v64 = vsel %vm59, %v46, 0
    %v67 = vsel %vm59, %v29, 0
    %v70 = vsel %vm59, %v30, 0
    %v73 = vsel %vm59, %v31, 0
    %v76 = vsel %vm59, %v32, 0
    %v79 = vsel %vm59, %v33, 0
    %v82 = vsel %vm59, %v34, 0
    %v85 = vsel %vm59, %v35, 0
    %v88 = vsel %vm59, %v36, 0
    %v91 = vsel %vm59, %v37, 0
    %v94 = vsel %vm59, %v38, 0
    %v97 = vsel %vm59, %v39, 0
    %v100 = vsel %vm59, %v40, 0
    %v103 = vsel %vm59, %v41, 0
    %v106 = vsel %vm59, %v42, 0
    %v109 = vsel %vm59, %v43, 0
    %v112 = vsel %vm59, %v44, 0
    %114 = vmatprep.subr.mxu0 0.0
    %115 = vmatpush1.xpose.msra.mxu0 %v112
    %116 = vmatprep.subr.mxu0 0.0
    %117 = vmatpush1.xpose.msra.mxu0 %v109
    %118 = vmatprep.subr.mxu0 0.0
    %119 = vmatpush1.xpose.msra.mxu0 %v106
    %120 = vmatprep.subr.mxu0 0.0
    %121 = vmatpush1.xpose.msra.mxu0 %v103
    %122 = vmatprep.subr.mxu0 0.0
    %123 = vmatpush1.xpose.msra.mxu0 %v100
    %124 = vmatprep.subr.mxu0 0.0
    %125 = vmatpush1.xpose.msra.mxu0 %v97
    %126 = vmatprep.subr.mxu0 0.0
    %127 = vmatpush1.xpose.msra.mxu0 %v94
    %128 = vmatprep.subr.mxu0 0.0
    %129 = vmatpush1.xpose.msra.mxu0 %v91
    %130 = vmatprep.subr.mxu0 0.0
    %131 = vmatpush1.xpose.msra.mxu0 %v88
    %132 = vmatprep.subr.mxu0 0.0
    %133 = vmatpush1.xpose.msra.mxu0 %v85
    %134 = vmatprep.subr.mxu0 0.0
    %135 = vmatpush1.xpose.msra.mxu0 %v82
    %136 = vmatprep.subr.mxu0 0.0
    %137 = vmatpush1.xpose.msra.mxu0 %v79
    %138 = vmatprep.subr.mxu0 0.0
    %139 = vmatpush1.xpose.msra.mxu0 %v76
    %140 = vmatprep.subr.mxu0 0.0
    %141 = vmatpush1.xpose.msra.mxu0 %v73
    %142 = vmatprep.subr.mxu0 0.0
    %143 = vmatpush1.xpose.msra.mxu0 %v70
    %144 = vmatprep.subr.mxu0 0.0
    %145 = vmatpush1.xpose.msra.mxu0 %v67
    %146 = vmatprep.subr.mxu0 0.0
    %147 = vmatpush2.xpose.msra.mxu0 0.0
    %148 = vmatprep.subr.mxu0 0.0
    %149 = vmatpush2.xpose.msra.mxu0 0.0
    %150 = vmatprep.subr.mxu0 0.0
    %151 = vmatpush2.xpose.msra.mxu0 0.0
    %152 = vmatprep.subr.mxu0 0.0
    %153 = vmatpush2.xpose.msra.mxu0 0.0
    %154 = vmatprep.subr.mxu0 0.0
    %155 = vmatpush2.xpose.msra.mxu0 0.0
    %156 = vmatprep.subr.mxu0 0.0
    %157 = vmatpush2.xpose.msra.mxu0 0.0
    %158 = vmatprep.subr.mxu0 0.0
    %159 = vmatpush2.xpose.msra.mxu0 0.0
    %160 = vmatprep.subr.mxu0 0.0
    %161 = vmatpush2.xpose.msra.mxu0 0.0
    %162 = vmatprep.subr.mxu0 0.0
    %163 = vmatpush2.xpose.msra.mxu0 0.0
    %164 = vmatprep.subr.mxu0 0.0
    %165 = vmatpush2.xpose.msra.mxu0 0.0
    %166 = vmatprep.subr.mxu0 0.0
    %167 = vmatpush2.xpose.msra.mxu0 0.0
    %168 = vmatprep.subr.mxu0 0.0
    %169 = vmatpush2.xpose.msra.mxu0 0.0
    %170 = vmatprep.subr.mxu0 0.0
    %171 = vmatpush2.xpose.msra.mxu0 0.0
    %172 = vmatprep.subr.mxu0 0.0
    %173 = vmatpush2.xpose.msra.mxu0 0.0
    %174 = vmatprep.subr.mxu0 0.0
    %175 = vmatpush2.xpose.msra.mxu0 0.0
    %176 = vmatprep.subr.mxu0 0.0
    %177 = vmatpush2.xpose.msra.mxu0 0.0
    %178 = vmatprep.mubr.f32.mxu0 0.0
    %179 = vmatmul.mubr.f32.gmra.mxu0 %v61
    %v180 = vpop.f32.mrf.mxu0
    %v181 = vadd.f32 %v52, %v180
    %v182 = vpop.f32.mrf.mxu0
    %183 = vmatprep.mubr.f32.mxu0 0.0
    %184 = vmatmul.mubr.f32.gmra.mxu0 %v64
    %v185 = vpop.f32.mrf.mxu0
    %v186 = vadd.f32 %v57, %v185
    %v187 = vpop.f32.mrf.mxu0
    %188 = vdwg.mxu0
    %v189 = vmax.f32 %v181, 0.0
    %v190 = vmax.f32 %v186, 0.0
    %v191 = vld [vmem:[%s3] sm:$0xff]
    %v192 = vld [vmem:[%s4] sm:$0xff]
    %194 = vset.pattern.permute.xlu0 0
    %195 = vperm.xlu0 %194, %v192
    %v196 = vpop.permute.xlu0 %195
    %vm198 = vcmask 130048
    %v200 = vsel %vm198, %v191, 0
    %202 = vmatprep.subr.mxu0 0.0
    %203 = vmatpush1.msra.mxu0 0.0
    %204 = vmatprep.subr.mxu0 0.0
    %205 = vmatpush1.msra.mxu0 0.0
    %206 = vmatprep.subr.mxu0 0.0
    %207 = vmatpush1.msra.mxu0 0.0
    %208 = vmatprep.subr.mxu0 0.0
    %209 = vmatpush1.msra.mxu0 0.0
    %210 = vmatprep.subr.mxu0 0.0
    %211 = vmatpush1.msra.mxu0 0.0
    %212 = vmatprep.subr.mxu0 0.0
    %213 = vmatpush1.msra.mxu0 0.0
    %214 = vmatprep.subr.mxu0 0.0
    %215 = vmatpush1.msra.mxu0 0.0
    %216 = vmatprep.subr.mxu0 0.0
    %217 = vmatpush1.msra.mxu0 0.0
    %218 = vmatprep.subr.mxu0 0.0
    %219 = vmatpush1.msra.mxu0 0.0
    %220 = vmatprep.subr.mxu0 0.0
    %221 = vmatpush1.msra.mxu0 0.0
    %222 = vmatprep.subr.mxu0 0.0
    %223 = vmatpush1.msra.mxu0 0.0
    %224 = vmatprep.subr.mxu0 0.0
    %225 = vmatpush1.msra.mxu0 0.0
    %226 = vmatprep.subr.mxu0 0.0
    %227 = vmatpush1.msra.mxu0 0.0
    %228 = vmatprep.subr.mxu0 0.0
    %229 = vmatpush1.msra.mxu0 0.0
    %230 = vmatprep.subr.mxu0 0.0
    %231 = vmatpush1.msra.mxu0 %v190
    %232 = vmatprep.subr.mxu0 0.0
    %233 = vmatpush1.msra.mxu0 %v189
    %234 = vmatprep.subr.mxu0 0.0
    %235 = vmatpush2.msra.mxu0 0.0
    %236 = vmatprep.subr.mxu0 0.0
    %237 = vmatpush2.msra.mxu0 0.0
    %238 = vmatprep.subr.mxu0 0.0
    %239 = vmatpush2.msra.mxu0 0.0
    %240 = vmatprep.subr.mxu0 0.0
    %241 = vmatpush2.msra.mxu0 0.0
    %242 = vmatprep.subr.mxu0 0.0
    %243 = vmatpush2.msra.mxu0 0.0
    %244 = vmatprep.subr.mxu0 0.0
    %245 = vmatpush2.msra.mxu0 0.0
    %246 = vmatprep.subr.mxu0 0.0
    %247 = vmatpush2.msra.mxu0 0.0
    %248 = vmatprep.subr.mxu0 0.0
    %249 = vmatpush2.msra.mxu0 0.0
    %250 = vmatprep.subr.mxu0 0.0
    %251 = vmatpush2.msra.mxu0 0.0
    %252 = vmatprep.subr.mxu0 0.0
    %253 = vmatpush2.msra.mxu0 0.0
    %254 = vmatprep.subr.mxu0 0.0
    %255 = vmatpush2.msra.mxu0 0.0
    %256 = vmatprep.subr.mxu0 0.0
    %257 = vmatpush2.msra.mxu0 0.0
    %258 = vmatprep.subr.mxu0 0.0
    %259 = vmatpush2.msra.mxu0 0.0
    %260 = vmatprep.subr.mxu0 0.0
    %261 = vmatpush2.msra.mxu0 0.0
    %262 = vmatprep.subr.mxu0 0.0
    %263 = vmatpush2.msra.mxu0 0.0
    %264 = vmatprep.subr.mxu0 0.0
    %265 = vmatpush2.msra.mxu0 0.0
    %266 = vmatprep.mubr.f32.mxu0 0.0
    %267 = vmatmul.mubr.f32.gmra.mxu0 %v200
    %v268 = vpop.f32.mrf.mxu0
    %v269 = vadd.f32 %v196, %v268
    %v270 = vpop.f32.mrf.mxu0
    %271 = vdwg.mxu0
    %v272 = vmax.f32 %v269, 0.0
    %v273 = vld [vmem:[%s5] sm:$0xff]
    %275 = vset.pattern.permute.xlu0 0
    %276 = vperm.xlu0 %275, %v273
    %v277 = vpop.permute.xlu0 %276
    %v279 = vmul.f32 %v277, %v272
    %v280 = vrot.slane %v279, 4
    %v281 = vadd.f32 %v279, %v280
    %v282 = vrot.slane %v281, 2
    %v283 = vadd.f32 %v281, %v282
    %v284 = vrot.slane %v283, 1
    %v285 = vadd.f32 %v283, %v284
    %v286 = vld [vmem:[#allocation2] sm:$0x1]
    %288 = vset.pattern.permute.xlu0 0
    %289 = vperm.xlu0 %288, %v286
    %v290 = vpop.permute.xlu0 %289
    %v292 = vlaneseq
    %v293 = vshrl.u32 %v292, 7
    %v294 = vsub.s32 0, %v293
    %v295 = vrot.slane %v290, %v294
    %v296 = vadd.f32 %v285, %v295
    %v297 = vand.u32 2147483647, %v296
    %v298 = vsub.f32 0.0, %v297
    %v299 = vmul.f32 %v298, 1.442695
    %v300 = vpow.pop %v299
    %v301 = vadd.f32 %v300, 1.0
    %v302 = vrcp.pop %v301
    %v303 = vmul.f32 1.0, %v302
    %vm304 = vcmp.ge.f32.partialorder %v296, 0.0
    %v305 = vmul.f32 %v300, %v303
    %v306 = vsel %vm304, %v303, %v305
    %307 = vst [vmem:[#allocation3] sm:$0x1] %v306
    // Predicated region
    $region30: #{tpu_custom_call.1} parent=1 // pred_check
      _
    $region31: #{tpu_custom_call.1} parent=1 // pred_check_branch
      %309 = sbr.rel (0) target = $region33
    $region32: #{tpu_custom_call.1} parent=1 // pred_region
      %s311 = ssub.s32 16, 16
      %312 = vsyncadd [#allocation4], %s311
      %s314 = sshll.u32 [#allocation3], 4
      %s315 = int_to_ptr.vmem [resolvable:$true] %s314
      %317 = dma.vmem_to_hbm [thread:$0]  %s315, 16, %s7, [#allocation4]
    $region33: #{tpu_custom_call.1} parent=1 // pred_fallthru
      _
    // Predicated region
    $region34: #{tpu_custom_call.1} parent=1 // pred_check
      _
    $region35: #{tpu_custom_call.1} parent=1 // pred_check_branch
      %319 = sbr.rel (0) target = $region37
    $region36: #{tpu_custom_call.1} parent=1 // pred_region
      %320 = dma.done [#allocation4], 16
    $region37: #{tpu_custom_call.1} parent=1 // pred_fallthru
      _
    %321 = vsyncpa [#allocation4], 1

</llo_original>
